<compile_context>
chip_gen: v7x
topology: tpu7x:2x2x1
jax: 0.10.0
libtpu: 0.0.40
codegen_flags: <defaults>
</compile_context>

<pallas_src>
import functools

import jax
import jax.numpy as jnp
from jax import lax
from jax.experimental import pallas as pl
from jax.experimental.pallas import tpu as pltpu

LN_EPS = 1e-5


# ----------------------------- helpers -----------------------------

def _row_tile(m, target=512):
    """Largest tile <= target that is a multiple of 8 and divides m."""
    assert m % 8 == 0, f"row count {m} must be a multiple of 8 (pad the sequence)"
    t = min(target, m)
    t -= t % 8
    while t >= 8 and m % t:
        t -= 8
    assert t >= 8 and m % t == 0
    return t


def _batch_tile(b, target=8):
    """Batch block for the attention grid: divides b, leaves >= 2 grid steps."""
    if b <= 1:
        return 1
    t = min(target, max(1, b // 2))
    while t > 1 and b % t:
        t -= 1
    return t


def _vmem_params(n_parallel, block_bytes, extra_bytes=0):
    """Deliberate scoped-VMEM budget: double-buffered blocks + f32 temporaries."""
    need = 2 * block_bytes + extra_bytes          # default pipeliner double-buffers
    limit = int(need * 1.25) + (4 << 20)
    limit = max(32 << 20, min(limit, 98 << 20))   # >= v5e need, < v5e/v6e physical
    return pltpu.CompilerParams(
        dimension_semantics=("parallel",) * n_parallel,
        vmem_limit_bytes=limit)


# ----------------------------- Pallas kernels -----------------------------

def _ln(x_f32, g_ref, b_ref):
    mu = jnp.mean(x_f32, axis=-1, keepdims=True)
    var = jnp.mean(jnp.square(x_f32 - mu), axis=-1, keepdims=True)
    xn = (x_f32 - mu) * lax.rsqrt(var + LN_EPS)
    return xn * g_ref[...].astype(jnp.float32) + b_ref[...].astype(jnp.float32)


def _ln_linear_kernel(x_ref, g_ref, b_ref, w_ref, bias_ref, o_ref):
    # Fused: LayerNorm -> x @ W + bias   (LN1 + QKV projection).
    h = _ln(x_ref[...].astype(jnp.float32), g_ref, b_ref).astype(w_ref.dtype)
    acc = jnp.dot(h, w_ref[...], preferred_element_type=jnp.float32)
    o_ref[...] = (acc + bias_ref[...].astype(jnp.float32)).astype(o_ref.dtype)


def _linear_residual_kernel(x_ref, w_ref, bias_ref, res_ref, o_ref):
    # Fused: out_proj + bias + residual add.
    acc = jnp.dot(x_ref[...], w_ref[...], preferred_element_type=jnp.float32)
    acc = acc + bias_ref[...].astype(jnp.float32) + res_ref[...].astype(jnp.float32)
    o_ref[...] = acc.astype(o_ref.dtype)


def _ln_mlp_residual_kernel(x_ref, g_ref, b_ref, w1_ref, b1_ref, w2_ref, b2_ref,
                            o_ref):
    # Fused: LN2 -> fc -> QuickGELU -> proj -> + residual.
    h = _ln(x_ref[...].astype(jnp.float32), g_ref, b_ref).astype(w1_ref.dtype)
    m = jnp.dot(h, w1_ref[...], preferred_element_type=jnp.float32)
    m = m + b1_ref[...].astype(jnp.float32)
    m = m * jax.nn.sigmoid(1.702 * m)                     # QuickGELU in f32
    out = jnp.dot(m.astype(w2_ref.dtype), w2_ref[...],
                  preferred_element_type=jnp.float32)
    # Re-read x_ref for the residual (no f32 copy of x held across the matmuls).
    out = out + b2_ref[...].astype(jnp.float32) + x_ref[...].astype(jnp.float32)
    o_ref[...] = out.astype(o_ref.dtype)


def _ln_project_kernel(x_ref, g_ref, b_ref, w_ref, o_ref):
    # Fused: final LayerNorm (on EOT rows only) -> bias-free text_projection.
    h = _ln(x_ref[...].astype(jnp.float32), g_ref, b_ref).astype(w_ref.dtype)
    o_ref[...] = jnp.dot(h, w_ref[...],
                         preferred_element_type=jnp.float32).astype(o_ref.dtype)


def _attention_kernel(qkv_ref, o_ref, *, num_heads, scale):
    # qkv tile: (Bb, L, 3D) laid out [q|k|v]; heads sliced in-kernel; each head
    # output stored directly into its o_ref column slice (no concat relayout).
    Bb, L, D3 = qkv_ref.shape
    D = D3 // 3
    Dh = D // num_heads
    qkv = qkv_ref[...]                                       # (Bb, L, 3D)

    row = lax.broadcasted_iota(jnp.int32, (1, L, L), 1)
    col = lax.broadcasted_iota(jnp.int32, (1, L, L), 2)
    causal = col <= row                                      # in-kernel causal mask

    for h in range(num_heads):                               # static unroll over heads
        q = qkv[:, :, h * Dh:(h + 1) * Dh] * scale           # scale folded into q
        k = qkv[:, :, D + h * Dh:D + (h + 1) * Dh]
        v = qkv[:, :, 2 * D + h * Dh:2 * D + (h + 1) * Dh]
        # Contract on the feature axis (no k transpose / relayout).
        s = lax.dot_general(q, k, (((2,), (2,)), ((0,), (0,))),
                            preferred_element_type=jnp.float32)     # (Bb, L, L) f32
        s = jnp.where(causal, s, -1e30)
        s = s - jnp.max(s, axis=-1, keepdims=True)
        p = jnp.exp(s)
        p = p * pl.reciprocal(jnp.sum(p, axis=-1, keepdims=True), approx=True)
        out = lax.dot_general(p.astype(v.dtype), v, (((2,), (1,)), ((0,), (0,))),
                              preferred_element_type=jnp.float32)   # (Bb, L, Dh)
        o_ref[:, :, h * Dh:(h + 1) * Dh] = out.astype(o_ref.dtype)


# ----------------------------- pallas_call wrappers -----------------------------

def ln_linear(x, g, b, w, bias, row_tile=512):
    M, D = x.shape
    N = w.shape[1]
    tm = _row_tile(M, row_tile)
    it, wt = x.dtype.itemsize, w.dtype.itemsize
    blocks = tm * D * it + tm * N * it + D * N * wt + (2 * D + N) * 4
    extra = tm * N * 4 + tm * D * 4                     # f32 acc + LN temp
    return pl.pallas_call(
        _ln_linear_kernel,
        out_shape=jax.ShapeDtypeStruct((M, N), x.dtype),
        grid=(M // tm,),
        in_specs=[pl.BlockSpec((tm, D), lambda i: (i, 0)),
                  pl.BlockSpec((1, D), lambda i: (0, 0)),
                  pl.BlockSpec((1, D), lambda i: (0, 0)),
                  pl.BlockSpec((D, N), lambda i: (0, 0)),
                  pl.BlockSpec((1, N), lambda i: (0, 0))],
        out_specs=pl.BlockSpec((tm, N), lambda i: (i, 0)),
        compiler_params=_vmem_params(1, blocks, extra),
    )(x, g.reshape(1, D), b.reshape(1, D), w, bias.reshape(1, N))


def linear_residual(x, w, bias, res, row_tile=512):
    M, K = x.shape
    N = w.shape[1]
    tm = _row_tile(M, row_tile)
    it, wt = x.dtype.itemsize, w.dtype.itemsize
    blocks = tm * K * it + 2 * tm * N * res.dtype.itemsize + K * N * wt + N * 4
    extra = tm * N * 4
    return pl.pallas_call(
        _linear_residual_kernel,
        out_shape=jax.ShapeDtypeStruct((M, N), res.dtype),
        grid=(M // tm,),
        in_specs=[pl.BlockSpec((tm, K), lambda i: (i, 0)),
                  pl.BlockSpec((K, N), lambda i: (0, 0)),
                  pl.BlockSpec((1, N), lambda i: (0, 0)),
                  pl.BlockSpec((tm, N), lambda i: (i, 0))],
        out_specs=pl.BlockSpec((tm, N), lambda i: (i, 0)),
        compiler_params=_vmem_params(1, blocks, extra),
    )(x, w, bias.reshape(1, N), res)


def ln_mlp_residual(x, g, b, w1, b1, w2, b2, row_tile=512):
    M, D = x.shape
    Dm = w1.shape[1]
    tm = _row_tile(M, row_tile)
    it, wt = x.dtype.itemsize, w1.dtype.itemsize
    blocks = 2 * tm * D * it + (D * Dm + Dm * D) * wt + (3 * D + Dm) * 4
    extra = tm * Dm * 4 + 2 * tm * D * 4                # f32 GELU intermediate + temps
    return pl.pallas_call(
        _ln_mlp_residual_kernel,
        out_shape=jax.ShapeDtypeStruct((M, D), x.dtype),
        grid=(M // tm,),
        in_specs=[pl.BlockSpec((tm, D), lambda i: (i, 0)),
                  pl.BlockSpec((1, D), lambda i: (0, 0)),
                  pl.BlockSpec((1, D), lambda i: (0, 0)),
                  pl.BlockSpec((D, Dm), lambda i: (0, 0)),
                  pl.BlockSpec((1, Dm), lambda i: (0, 0)),
                  pl.BlockSpec((Dm, D), lambda i: (0, 0)),
                  pl.BlockSpec((1, D), lambda i: (0, 0))],
        out_specs=pl.BlockSpec((tm, D), lambda i: (i, 0)),
        compiler_params=_vmem_params(1, blocks, extra),
    )(x, g.reshape(1, D), b.reshape(1, D), w1, b1.reshape(1, Dm), w2,
      b2.reshape(1, D))


def attention(qkv, num_heads):
    B, L, D3 = qkv.shape
    D = D3 // 3
    Dh = D // num_heads
    bb = _batch_tile(B)
    it = qkv.dtype.itemsize
    blocks = bb * L * D3 * it + bb * L * D * it
    extra = 2 * bb * L * L * 4 + bb * L * Dh * 4        # f32 scores/probs + head out
    kern = functools.partial(_attention_kernel, num_heads=num_heads,
                             scale=1.0 / (Dh ** 0.5))
    return pl.pallas_call(
        kern,
        out_shape=jax.ShapeDtypeStruct((B, L, D), qkv.dtype),
        grid=(B // bb,),
        in_specs=[pl.BlockSpec((bb, L, D3), lambda i: (i, 0, 0))],
        out_specs=pl.BlockSpec((bb, L, D), lambda i: (i, 0, 0)),
        compiler_params=_vmem_params(1, blocks, extra),
    )(qkv)


def ln_project(x_eot, g, b, w):
    # Tiny fused tail: LN over (B, D) EOT rows + bias-free text_projection.
    B, D = x_eot.shape
    E = w.shape[1]
    blocks = B * D * x_eot.dtype.itemsize + B * E * 4 + D * E * w.dtype.itemsize + 2 * D * 4
    return pl.pallas_call(
        _ln_project_kernel,
        out_shape=jax.ShapeDtypeStruct((B, E), jnp.float32),
        grid=(1,),
        in_specs=[pl.BlockSpec((B, D), lambda i: (0, 0)),
                  pl.BlockSpec((1, D), lambda i: (0, 0)),
                  pl.BlockSpec((1, D), lambda i: (0, 0)),
                  pl.BlockSpec((D, E), lambda i: (0, 0))],
        out_specs=pl.BlockSpec((B, E), lambda i: (0, 0)),
        compiler_params=_vmem_params(1, blocks, B * D * 4),
    )(x_eot, g.reshape(1, D), b.reshape(1, D), w)


# ----------------------------- model -----------------------------

def residual_attention_block(x, p, num_heads, row_tile):
    B, L, D = x.shape
    xf = x.reshape(B * L, D)

    # LN1 + QKV projection fused; heads are split inside the attention kernel.
    qkv = ln_linear(xf, p["ln1_g"], p["ln1_b"], p["in_proj_w"], p["in_proj_b"],
                    row_tile)                                   # (B*L, 3D)
    a = attention(qkv.reshape(B, L, 3 * D), num_heads)          # (B, L, D)
    xf = linear_residual(a.reshape(B * L, D), p["out_proj_w"], p["out_proj_b"],
                         xf, row_tile)
    # LN2 + MLP (fc -> QuickGELU -> proj) + residual fused.
    xf = ln_mlp_residual(xf, p["ln2_g"], p["ln2_b"], p["fc_w"], p["fc_b"],
                         p["proj_w"], p["proj_b"], row_tile)
    return xf.reshape(B, L, D)


def text_encoder(prompts, tokenized_prompts, params, num_heads,
                 row_tile=512, compute_dtype=jnp.bfloat16):
    B, L, D = prompts.shape
    Lp = (L + 7) // 8 * 8
    pos = params["pos_embed"].astype(jnp.float32)
    x = prompts.astype(jnp.float32)
    if Lp != L:
        # Pad at the END: causal mask keeps pad keys invisible to real queries;
        # the EOT gather below only indexes un-padded rows.
        x = jnp.pad(x, ((0, 0), (0, Lp - L), (0, 0)))
        pos = jnp.pad(pos, ((0, Lp - L), (0, 0)))
    # Positional add stays in XLA (trivial VPU work; dedicated kernel was pure
    # launch overhead).  The PyTorch permute(1,0,2) round trip is layout-only.
    x = (x + pos[None]).astype(compute_dtype)

    for layer in params["layers"]:
        x = residual_attention_block(x, layer, num_heads, row_tile)

    # EOT gather BEFORE the final LayerNorm (LN is row-wise, so it commutes),
    # then fused LN + text_projection on just (B, D) rows.
    eot_idx = jnp.argmax(tokenized_prompts, axis=-1)            # (B,)
    # TODO(synk): EOT row gather stays in XLA; could become a scalar-prefetch
    # pl.Element-indexed BlockSpec fused into ln_project.
    x_eot = x[jnp.arange(B), eot_idx]                           # (B, D)
    return ln_project(x_eot, params["lnf_g"], params["lnf_b"],
                      params["text_projection"])                # (B, embed_dim) f32


# ----------------------------- params / reference -----------------------------

def init_params(key, *, depth, width, seq_len, embed_dim):
    def nrm(k, shape, scale=0.02):
        return (scale * jax.random.normal(k, shape)).astype(jnp.float32)

    keys = iter(jax.random.split(key, 2 + depth * 4))
    params = {
        "pos_embed": nrm(next(keys), (seq_len, width)),
        "lnf_g": jnp.ones((width,), jnp.float32),
        "lnf_b": jnp.zeros((width,), jnp.float32),
        "text_projection": nrm(next(keys), (width, embed_dim), scale=width ** -0.5),
        "layers": [],
    }
    for _ in range(depth):
        params["layers"].append({
            "ln1_g": jnp.ones((width,), jnp.float32),
            "ln1_b": jnp.zeros((width,), jnp.float32),
            "in_proj_w": nrm(next(keys), (width, 3 * width)),   # stored (in, out), [q|k|v]
            "in_proj_b": jnp.zeros((3 * width,), jnp.float32),
            "out_proj_w": nrm(next(keys), (width, width)),
            "out_proj_b": jnp.zeros((width,), jnp.float32),
            "ln2_g": jnp.ones((width,), jnp.float32),
            "ln2_b": jnp.zeros((width,), jnp.float32),
            "fc_w": nrm(next(keys), (width, 4 * width)),
            "fc_b": jnp.zeros((4 * width,), jnp.float32),
            "proj_w": nrm(next(keys), (4 * width, width)),
            "proj_b": jnp.zeros((width,), jnp.float32),
        })
    return params


def cast_params(params, dtype=jnp.bfloat16):
    """Cast the large matmul weights to bf16; LN params / biases stay f32."""
    out = dict(params)
    out["text_projection"] = params["text_projection"].astype(dtype)
    out["layers"] = []
    for p in params["layers"]:
        q = dict(p)
        for k in ("in_proj_w", "out_proj_w", "fc_w", "proj_w"):
            q[k] = p[k].astype(dtype)
        out["layers"].append(q)
    return out


def reference_text_encoder(prompts, tokenized_prompts, params, num_heads):
    def ln(x, g, b):
        mu = x.mean(-1, keepdims=True)
        var = ((x - mu) ** 2).mean(-1, keepdims=True)
        return (x - mu) / jnp.sqrt(var + LN_EPS) * g + b

    B, L, D = prompts.shape
    Dh = D // num_heads
    mask = jnp.triu(jnp.full((L, L), -jnp.inf, jnp.float32), k=1)
    x = prompts + params["pos_embed"][None]
    for p in params["layers"]:
        h = ln(x, p["ln1_g"], p["ln1_b"])
        qkv = h @ p["in_proj_w"] + p["in_proj_b"]
        q, k, v = jnp.split(qkv, 3, axis=-1)
        split = lambda t: t.reshape(B, L, num_heads, Dh).transpose(0, 2, 1, 3)
        q, k, v = split(q), split(k), split(v)
        s = jnp.einsum("bhqd,bhkd->bhqk", q, k) / (Dh ** 0.5) + mask
        a = jax.nn.softmax(s, axis=-1)
        o = jnp.einsum("bhqk,bhkd->bhqd", a, v).transpose(0, 2, 1, 3).reshape(B, L, D)
        x = x + (o @ p["out_proj_w"] + p["out_proj_b"])
        h2 = ln(x, p["ln2_g"], p["ln2_b"])
        m = h2 @ p["fc_w"] + p["fc_b"]
        m = m * jax.nn.sigmoid(1.702 * m)
        x = x + (m @ p["proj_w"] + p["proj_b"])
    x = ln(x, params["lnf_g"], params["lnf_b"])
    eot = jnp.argmax(tokenized_prompts, axis=-1)
    return x[jnp.arange(B), eot] @ params["text_projection"]


# ----------------------------- main -----------------------------

if __name__ == "__main__":
    B, L, D, H, depth, E = 2, 8, 32, 4, 2, 16
    key = jax.random.PRNGKey(0)
    kp, kx = jax.random.split(key)
    params_f32 = init_params(kp, depth=depth, width=D, seq_len=L, embed_dim=E)
    params_bf16 = cast_params(params_f32, jnp.bfloat16)

    prompts = 0.02 * jax.random.normal(kx, (B, L, D), jnp.float32)
    tokenized_prompts = jnp.array(
        [[49406, 320, 3306, 12, 49407, 0, 0, 0],
         [49406, 1125, 539, 49407, 0, 0, 0, 0]], dtype=jnp.int32)

    # row_tile=8 at toy sizes so the row-tiled grids actually run with >1 step.
    out = text_encoder(prompts, tokenized_prompts, params_bf16, H, row_tile=8)
    out = jax.block_until_ready(out)

    ref = reference_text_encoder(prompts, tokenized_prompts, params_f32, H)
    assert out.shape == (B, E), out.shape
    assert bool(jnp.all(jnp.isfinite(out)))
    # bf16 kernel path vs f32 reference: loose tolerance accounts for bf16
    # weight/activation quantization and the approx softmax reciprocal.
    err = float(jnp.max(jnp.abs(out - ref)))
    assert bool(jnp.allclose(out, ref, rtol=1e-1, atol=7.5e-2)), err
    print("KERNEL_OK")
</pallas_src>

<mosaic_0001>
module attributes {stable_mosaic.version = 11 : i64} {
  func.func @_ln_linear_kernel(%arg0: i32, %arg1: memref<8x32xbf16, #tpu.memory_space<vmem>>, %arg2: memref<1x32xf32, #tpu.memory_space<vmem>>, %arg3: memref<1x32xf32, #tpu.memory_space<vmem>>, %arg4: memref<32x96xbf16, #tpu.memory_space<vmem>>, %arg5: memref<1x96xf32, #tpu.memory_space<vmem>>, %arg6: memref<8x96xbf16, #tpu.memory_space<vmem>>) attributes {dimension_semantics = [#tpu.dimension_semantics<parallel>], iteration_bounds = array<i64: 2>, scalar_prefetch = 0 : i64, scratch_operands = 0 : i64, tpu.core_type = #tpu.core_type<tc>, window_params = [{transform_indices = @transform_0, window_bounds = array<i64: 8, 32>}, {pipeline_mode = #tpu.pipeline_mode<synchronous>, transform_indices = @transform_1, window_bounds = array<i64: 1, 32>}, {pipeline_mode = #tpu.pipeline_mode<synchronous>, transform_indices = @transform_2, window_bounds = array<i64: 1, 32>}, {pipeline_mode = #tpu.pipeline_mode<synchronous>, transform_indices = @transform_3, window_bounds = array<i64: 32, 96>}, {pipeline_mode = #tpu.pipeline_mode<synchronous>, transform_indices = @transform_4, window_bounds = array<i64: 1, 96>}, {transform_indices = @transform_5, window_bounds = array<i64: 8, 96>}]} {
    %c0 = arith.constant 0 : index
    %c0_0 = arith.constant 0 : index
    %0 = vector.load %arg1[%c0, %c0_0] : memref<8x32xbf16, #tpu.memory_space<vmem>>, vector<8x32xbf16>
    %1 = arith.extf %0 : vector<8x32xbf16> to vector<8x32xf32>
    %cst = arith.constant dense<0.000000e+00> : vector<8xf32>
    %2 = vector.multi_reduction <add>, %1, %cst [1] : vector<8x32xf32> to vector<8xf32>
    %3 = vector.shape_cast %2 : vector<8xf32> to vector<8x1xf32>
    %cst_1 = arith.constant 3.200000e+01 : f32
    %4 = vector.broadcast %cst_1 : f32 to vector<8x1xf32>
    %5 = arith.divf %3, %4 : vector<8x1xf32>
    %6 = vector.broadcast %5 : vector<8x1xf32> to vector<8x32xf32>
    %7 = arith.subf %1, %6 : vector<8x32xf32>
    %8 = arith.mulf %7, %7 : vector<8x32xf32>
    %cst_2 = arith.constant dense<0.000000e+00> : vector<8xf32>
    %9 = vector.multi_reduction <add>, %8, %cst_2 [1] : vector<8x32xf32> to vector<8xf32>
    %10 = vector.shape_cast %9 : vector<8xf32> to vector<8x1xf32>
    %cst_3 = arith.constant 3.200000e+01 : f32
    %11 = vector.broadcast %cst_3 : f32 to vector<8x1xf32>
    %12 = arith.divf %10, %11 : vector<8x1xf32>
    %13 = vector.broadcast %5 : vector<8x1xf32> to vector<8x32xf32>
    %14 = arith.subf %1, %13 : vector<8x32xf32>
    %cst_4 = arith.constant 9.99999974E-6 : f32
    %15 = vector.broadcast %cst_4 : f32 to vector<8x1xf32>
    %16 = arith.addf %12, %15 : vector<8x1xf32>
    %17 = math.rsqrt %16 : vector<8x1xf32>
    %18 = vector.broadcast %17 : vector<8x1xf32> to vector<8x32xf32>
    %19 = arith.mulf %14, %18 : vector<8x32xf32>
    %c0_5 = arith.constant 0 : index
    %c0_6 = arith.constant 0 : index
    %20 = vector.load %arg2[%c0_5, %c0_6] : memref<1x32xf32, #tpu.memory_space<vmem>>, vector<1x32xf32>
    %21 = vector.broadcast %20 : vector<1x32xf32> to vector<8x32xf32>
    %22 = arith.mulf %19, %21 : vector<8x32xf32>
    %c0_7 = arith.constant 0 : index
    %c0_8 = arith.constant 0 : index
    %23 = vector.load %arg3[%c0_7, %c0_8] : memref<1x32xf32, #tpu.memory_space<vmem>>, vector<1x32xf32>
    %24 = vector.broadcast %23 : vector<1x32xf32> to vector<8x32xf32>
    %25 = arith.addf %22, %24 : vector<8x32xf32>
    %26 = arith.truncf %25 : vector<8x32xf32> to vector<8x32xbf16>
    %c0_9 = arith.constant 0 : index
    %c0_10 = arith.constant 0 : index
    %27 = vector.load %arg4[%c0_9, %c0_10] : memref<32x96xbf16, #tpu.memory_space<vmem>>, vector<32x96xbf16>
    %cst_11 = arith.constant dense<0.000000e+00> : vector<8x96xf32>
    %28 = tpu.matmul %26, %27, %cst_11 {dimension_numbers = #tpu.dot_dimension_numbers<[1], [0], [0], [1], [0, 0, 1, 1], [], []>} : vector<8x32xbf16>, vector<32x96xbf16>, vector<8x96xf32> -> vector<8x96xf32>
    %c0_12 = arith.constant 0 : index
    %c0_13 = arith.constant 0 : index
    %29 = vector.load %arg5[%c0_12, %c0_13] : memref<1x96xf32, #tpu.memory_space<vmem>>, vector<1x96xf32>
    %30 = vector.broadcast %29 : vector<1x96xf32> to vector<8x96xf32>
    %31 = arith.addf %28, %30 : vector<8x96xf32>
    %32 = arith.truncf %31 : vector<8x96xf32> to vector<8x96xbf16>
    %c0_14 = arith.constant 0 : index
    %c0_15 = arith.constant 0 : index
    %33 = vector.load %arg6[%c0_14, %c0_15] : memref<8x96xbf16, #tpu.memory_space<vmem>>, vector<8x96xbf16>
    tpu.vector_store %arg6[%c0_14, %c0_15], %32 {strides = array<i32>} : memref<8x96xbf16, #tpu.memory_space<vmem>>, vector<8x96xbf16>,
    return
  }
  func.func @transform_0(%arg0: i32) -> (i32, i32) {
    %c0_i32 = arith.constant 0 : i32
    %c0_i32_0 = arith.constant 0 : i32
    return %arg0, %c0_i32 : i32, i32
  }
  func.func @transform_1(%arg0: i32) -> (i32, i32) {
    %c0_i32 = arith.constant 0 : i32
    %c0_i32_0 = arith.constant 0 : i32
    %c0_i32_1 = arith.constant 0 : i32
    return %c0_i32, %c0_i32_0 : i32, i32
  }
  func.func @transform_2(%arg0: i32) -> (i32, i32) {
    %c0_i32 = arith.constant 0 : i32
    %c0_i32_0 = arith.constant 0 : i32
    %c0_i32_1 = arith.constant 0 : i32
    return %c0_i32, %c0_i32_0 : i32, i32
  }
  func.func @transform_3(%arg0: i32) -> (i32, i32) {
    %c0_i32 = arith.constant 0 : i32
    %c0_i32_0 = arith.constant 0 : i32
    %c0_i32_1 = arith.constant 0 : i32
    return %c0_i32, %c0_i32_0 : i32, i32
  }
  func.func @transform_4(%arg0: i32) -> (i32, i32) {
    %c0_i32 = arith.constant 0 : i32
    %c0_i32_0 = arith.constant 0 : i32
    %c0_i32_1 = arith.constant 0 : i32
    return %c0_i32, %c0_i32_0 : i32, i32
  }
  func.func @transform_5(%arg0: i32) -> (i32, i32) {
    %c0_i32 = arith.constant 0 : i32
    %c0_i32_0 = arith.constant 0 : i32
    return %arg0, %c0_i32 : i32, i32
  }
}

</mosaic_0001>

<llo_original>
// kernel: tpu_custom_call.1
$region0: #{tpu_custom_call.1}
  #allocation0 [shape = 'u32[]', space=smem, size = 0x4, offset = 0x4, fixed_abs, tag = 'smem constant byte address 0x4 - core index']
  #allocation1 [shape = 'u32[144,128]{1,0:T(1,128)}', space=vmem, size = 0x12000, scoped, tag = 'internal scratch']
  %s0 = inlined_call_operand.hbm [shape: bf16[16,32], index: 0, kind: input, shape index: {}]
  %s1 = inlined_call_operand.vmem [shape: f32[1,32], index: 1, kind: input, shape index: {}]
  %s2 = inlined_call_operand.vmem [shape: f32[1,32], index: 2, kind: input, shape index: {}]
  %s3 = inlined_call_operand.hbm [shape: bf16[32,96], index: 3, kind: input, shape index: {}]
  %s4 = inlined_call_operand.vmem [shape: f32[1,96], index: 4, kind: input, shape index: {}]
  %s5 = inlined_call_operand.hbm [shape: bf16[16,96], index: 5, kind: output, shape index: {}]
  %s6 = sld [smem:[#allocation0]]
  $region61: #{tpu_custom_call.1} parent=0
    _
  %s8 = ssub.s32 1, %s6
  %s9 = scalar_select 0, %s8, %s6
  $region1: #{tpu_custom_call.1} parent=0
    #allocation2 [shape = 'u8[4096]{0}', space=vmem, size = 0x1000, scoped, tag = 'input window, operand 0']
    #allocation3 [shape = 's32[2]{0}', space=sflag, size = 0x8, scoped, tag = 'scoped memory for tpu_custom_call.1']
    #allocation4 [shape = 's32[2]{0}', space=sflag, size = 0x8, scoped, tag = 'scoped memory for tpu_custom_call.1']
    #allocation5 [shape = 'u8[8192]{0}', space=vmem, size = 0x2000, scoped, tag = 'input window, operand 3, single buffered']
    #allocation6 [shape = 's32[1]{0}', space=sflag, size = 0x4, scoped, tag = 'scoped memory for tpu_custom_call.1']
    #allocation7 [shape = 'u8[4096]{0}', space=vmem, size = 0x1000, scoped, tag = 'output window, operand 0']
    %10 = vsyncpa [#allocation3], 0
    %s11 = scalar_lea.sflag [#allocation3], 1
    %12 = vsyncpa %s11, 0
    %13 = vsyncpa [#allocation6], 0
    %14 = vsyncpa [#allocation4], 0
    %s15 = scalar_lea.sflag [#allocation4], 1
    %16 = vsyncpa %s15, 0
    loop: start=0, step=1, limit=4
    $region2: #{tpu_custom_call.1} parent=1 // loop_pre_header
      _
    $region3: #{tpu_custom_call.1} parent=1 // loop_header
      %s18 = sphi 0, %s22
      %p19 = scmp.ge.s32.totalorder %s18, 4
      %s28 = sphi 0, %s30
      %s31 = sphi 0, %s28
      %s32 = sphi 0, %s31
      %s48 = sphi 0, %s32
      %s52 = sphi 0, %s52
      %s54 = sphi 0, %s52
      %s55 = sphi 0, %s54
      %s69 = sphi 0, %s55
      %s73 = sphi 0, %s73
      %s75 = sphi 0, %s73
      %s76 = sphi 0, %s75
      %s90 = sphi 0, %s76
      %s94 = sphi 0, %s94
      %s96 = sphi 0, %s94
      %s97 = sphi 0, %s96
      %s111 = sphi 0, %s97
      %s115 = sphi 0, %s115
      %s117 = sphi 0, %s115
      %s118 = sphi 0, %s117
      %s132 = sphi 0, %s118
      %s138 = sphi 0, %s140
      %s141 = sphi 0, %s138
      %s142 = sphi 0, %s141
      %s158 = sphi 0, %s142
    $region4: #{tpu_custom_call.1} parent=1 // loop_header_branch
      %21 = sbr.rel (%p19) target = $region8
    $region5: #{tpu_custom_call.1} parent=1 // loop_body
      %s23 = ssub.s32 %s18, 1
      %s24 = ssub.s32 %s18, 2
      %s25 = sadd.s32 %s18, 1
      %s26 = ssub.s32 %s18, %s25
      %p27 = scmp.eq.s32.totalorder %s26, 0
      %s29 = sadd.s32 %s28, 1
      %s30 = scalar_select %p27, %s28, %s29
      %p33 = pneg %p27
      %p34 = scmp.eq.s32.totalorder %s18, 1
      %p35 = por %p33, %p34
      %p36 = scmp.ne.s32.totalorder %s28, %s31
      %p37 = scmp.eq.s32.totalorder %s18, 0
      %p38 = por %p36, %p37
      %p39 = scmp.ne.s32.totalorder %s28, %s31
      %p40 = scmp.eq.s32.totalorder %s23, 1
      %p41 = por %p39, %p40
      %p42 = scmp.ne.s32.totalorder %s31, %s32
      %p43 = scmp.eq.s32.totalorder %s23, 0
      %p44 = por %p42, %p43
      %p45 = scmp.ne.s32.totalorder %s31, %s32
      %p46 = scmp.eq.s32.totalorder %s24, 1
      %p47 = por %p45, %p46
      %p49 = scmp.ne.s32.totalorder %s32, %s48
      %p50 = scmp.eq.s32.totalorder %s24, 0
      %p51 = por %p49, %p50
      %s53 = sadd.s32 %s52, 1
      %p56 = scmp.eq.s32.totalorder %s18, 1
      %p57 = scmp.ne.s32.totalorder %s52, %s54
      %p58 = scmp.eq.s32.totalorder %s18, 0
      %p59 = por %p57, %p58
      %p60 = scmp.ne.s32.totalorder %s52, %s54
      %p61 = scmp.eq.s32.totalorder %s23, 1
      %p62 = por %p60, %p61
      %p63 = scmp.ne.s32.totalorder %s54, %s55
      %p64 = scmp.eq.s32.totalorder %s23, 0
      %p65 = por %p63, %p64
      %p66 = scmp.ne.s32.totalorder %s54, %s55
      %p67 = scmp.eq.s32.totalorder %s24, 1
      %p68 = por %p66, %p67
      %p70 = scmp.ne.s32.totalorder %s55, %s69
      %p71 = scmp.eq.s32.totalorder %s24, 0
      %p72 = por %p70, %p71
      %s74 = sadd.s32 %s73, 1
      %p77 = scmp.eq.s32.totalorder %s18, 1
      %p78 = scmp.ne.s32.totalorder %s73, %s75
      %p79 = scmp.eq.s32.totalorder %s18, 0
      %p80 = por %p78, %p79
      %p81 = scmp.ne.s32.totalorder %s73, %s75
      %p82 = scmp.eq.s32.totalorder %s23, 1
      %p83 = por %p81, %p82
      %p84 = scmp.ne.s32.totalorder %s75, %s76
      %p85 = scmp.eq.s32.totalorder %s23, 0
      %p86 = por %p84, %p85
      %p87 = scmp.ne.s32.totalorder %s75, %s76
      %p88 = scmp.eq.s32.totalorder %s24, 1
      %p89 = por %p87, %p88
      %p91 = scmp.ne.s32.totalorder %s76, %s90
      %p92 = scmp.eq.s32.totalorder %s24, 0
      %p93 = por %p91, %p92
      %s95 = sadd.s32 %s94, 1
      %p98 = scmp.eq.s32.totalorder %s18, 1
      %p99 = scmp.ne.s32.totalorder %s94, %s96
      %p100 = scmp.eq.s32.totalorder %s18, 0
      %p101 = por %p99, %p100
      %p102 = scmp.ne.s32.totalorder %s94, %s96
      %p103 = scmp.eq.s32.totalorder %s23, 1
      %p104 = por %p102, %p103
      %p105 = scmp.ne.s32.totalorder %s96, %s97
      %p106 = scmp.eq.s32.totalorder %s23, 0
      %p107 = por %p105, %p106
      %p108 = scmp.ne.s32.totalorder %s96, %s97
      %p109 = scmp.eq.s32.totalorder %s24, 1
      %p110 = por %p108, %p109
      %p112 = scmp.ne.s32.totalorder %s97, %s111
      %p113 = scmp.eq.s32.totalorder %s24, 0
      %p114 = por %p112, %p113
      %s116 = sadd.s32 %s115, 1
      %p119 = scmp.eq.s32.totalorder %s18, 1
      %p120 = scmp.ne.s32.totalorder %s115, %s117
      %p121 = scmp.eq.s32.totalorder %s18, 0
      %p122 = por %p120, %p121
      %p123 = scmp.ne.s32.totalorder %s115, %s117
      %p124 = scmp.eq.s32.totalorder %s23, 1
      %p125 = por %p123, %p124
      %p126 = scmp.ne.s32.totalorder %s117, %s118
      %p127 = scmp.eq.s32.totalorder %s23, 0
      %p128 = por %p126, %p127
      %p129 = scmp.ne.s32.totalorder %s117, %s118
      %p130 = scmp.eq.s32.totalorder %s24, 1
      %p131 = por %p129, %p130
      %p133 = scmp.ne.s32.totalorder %s118, %s132
      %p134 = scmp.eq.s32.totalorder %s24, 0
      %p135 = por %p133, %p134
      %s136 = ssub.s32 %s18, %s25
      %p137 = scmp.eq.s32.totalorder %s136, 0
      %s139 = sadd.s32 %s138, 1
      %s140 = scalar_select %p137, %s138, %s139
      %p143 = pneg %p137
      %p144 = scmp.eq.s32.totalorder %s18, 1
      %p145 = por %p143, %p144
      %p146 = scmp.ne.s32.totalorder %s138, %s141
      %p147 = scmp.eq.s32.totalorder %s18, 0
      %p148 = por %p146, %p147
      %p149 = scmp.ne.s32.totalorder %s138, %s141
      %p150 = scmp.eq.s32.totalorder %s23, 1
      %p151 = por %p149, %p150
      %p152 = scmp.ne.s32.totalorder %s141, %s142
      %p153 = scmp.eq.s32.totalorder %s23, 0
      %p154 = por %p152, %p153
      %p155 = scmp.ne.s32.totalorder %s141, %s142
      %p156 = scmp.eq.s32.totalorder %s24, 1
      %p157 = por %p155, %p156
      %p159 = scmp.ne.s32.totalorder %s142, %s158
      %p160 = scmp.eq.s32.totalorder %s24, 0
      %p161 = por %p159, %p160
      %p162 = scmp.le.s32.totalorder 1, %s18
      %p163 = scmp.lt.s32.totalorder %s18, 3
      %p164 = pnand %p162, %p163
      %p165 = pneg %p164
      // Predicated region
      $region9: #{tpu_custom_call.1} parent=5 // pred_check
        _
      $region10: #{tpu_custom_call.1} parent=5 // pred_check_branch
        %167 = sbr.rel (%p164) target = $region12
      $region11: #{tpu_custom_call.1} parent=5 // pred_region
        %s168 = ssub.s32 %s18, 1
        // Predicated region
        $region13: #{tpu_custom_call.1} parent=11 // pred_check
          %p169 = pneg %p65
        $region14: #{tpu_custom_call.1} parent=11 // pred_check_branch
          %171 = sbr.rel (%p169) target = $region16
        $region15: #{tpu_custom_call.1} parent=11 // pred_region
          _
        $region16: #{tpu_custom_call.1} parent=11 // pred_fallthru
          _
        // Predicated region
        $region17: #{tpu_custom_call.1} parent=11 // pred_check
          %p172 = pneg %p86
        $region18: #{tpu_custom_call.1} parent=11 // pred_check_branch
          %174 = sbr.rel (%p172) target = $region20
        $region19: #{tpu_custom_call.1} parent=11 // pred_region
          _
        $region20: #{tpu_custom_call.1} parent=11 // pred_fallthru
          _
        // Predicated region
        $region21: #{tpu_custom_call.1} parent=11 // pred_check
          %p175 = pneg %p107
        $region22: #{tpu_custom_call.1} parent=11 // pred_check_branch
          %177 = sbr.rel (%p175) target = $region24
        $region23: #{tpu_custom_call.1} parent=11 // pred_region
          %s179 = ssub.s32 256, 256
          %180 = vsyncadd [#allocation6], %s179
          %s181 = sshll.u32 [#allocation5], 4
          %s182 = int_to_ptr.vmem [resolvable:$true] %s181
          %187 = dma.hbm_to_vmem [thread:$0]  %s3, 256, %s182, [#allocation6], 64, 64, 4
        $region24: #{tpu_custom_call.1} parent=11 // pred_fallthru
          _
        // Predicated region
        $region25: #{tpu_custom_call.1} parent=11 // pred_check
          %p188 = pneg %p128
        $region26: #{tpu_custom_call.1} parent=11 // pred_check_branch
          %190 = sbr.rel (%p188) target = $region28
        $region27: #{tpu_custom_call.1} parent=11 // pred_region
          _
        $region28: #{tpu_custom_call.1} parent=11 // pred_fallthru
          _
      $region12: #{tpu_custom_call.1} parent=5 // pred_fallthru
        _
      %p191 = scmp.lt.s32.totalorder %s18, 2
      // Predicated region
      $region29: #{tpu_custom_call.1} parent=5 // pred_check
        %p192 = pneg %p191
      $region30: #{tpu_custom_call.1} parent=5 // pred_check_branch
        %194 = sbr.rel (%p192) target = $region32
      $region31: #{tpu_custom_call.1} parent=5 // pred_region
        // Predicated region
        $region33: #{tpu_custom_call.1} parent=31 // pred_check
          %p195 = pneg %p38
        $region34: #{tpu_custom_call.1} parent=31 // pred_check_branch
          %197 = sbr.rel (%p195) target = $region36
        $region35: #{tpu_custom_call.1} parent=31 // pred_region
          %s198 = sand.u32 %s28, 1
          %s199 = scalar_lea.sflag [#allocation3], %s198
          %s200 = sand.u32 %s28, 1
          %s201 = smul.addr %s200, 4
          %s202 = scalar_lea.vmem [#allocation2], %s201
          %s204 = ssub.s32 64, 64
          %205 = vsyncadd %s199, %s204
          %s206 = smul.addr %s18, 64
          %s207 = scalar_lea.hbm %s0, %s206
          %s209 = sshll.u32 %s202, 4
          %s210 = int_to_ptr.vmem [resolvable:$true] %s209
          %212 = dma.hbm_to_vmem [thread:$0]  %s207, 64, %s210, %s199
        $region36: #{tpu_custom_call.1} parent=31 // pred_fallthru
          _
      $region32: #{tpu_custom_call.1} parent=5 // pred_fallthru
        _
      %p213 = scmp.le.s32.totalorder 1, %s18
      %p214 = scmp.lt.s32.totalorder %s18, 3
      %p215 = pnand %p213, %p214
      %p216 = pneg %p215
      // Predicated region
      $region37: #{tpu_custom_call.1} parent=5 // pred_check
        _
      $region38: #{tpu_custom_call.1} parent=5 // pred_check_branch
        %218 = sbr.rel (%p215) target = $region40
      $region39: #{tpu_custom_call.1} parent=5 // pred_region
        %s219 = ssub.s32 %s18, 1
        %s220 = sand.u32 %s31, 1
        %s221 = scalar_lea.sflag [#allocation3], %s220
        %s222 = sand.u32 %s31, 1
        %s223 = smul.addr %s222, 4
        %s224 = scalar_lea.vmem [#allocation2], %s223
        // Predicated region
        $region41: #{tpu_custom_call.1} parent=39 // pred_check
          %p225 = pneg %p44
        $region42: #{tpu_custom_call.1} parent=39 // pred_check_branch
          %227 = sbr.rel (%p225) target = $region44
        $region43: #{tpu_custom_call.1} parent=39 // pred_region
          %228 = dma.done %s221, 64
        $region44: #{tpu_custom_call.1} parent=39 // pred_fallthru
          _
        // Predicated region
        $region45: #{tpu_custom_call.1} parent=39 // pred_check
          %p229 = pneg %p107
        $region46: #{tpu_custom_call.1} parent=39 // pred_check_branch
          %231 = sbr.rel (%p229) target = $region48
        $region47: #{tpu_custom_call.1} parent=39 // pred_region
          %232 = dma.done [#allocation6], 256
        $region48: #{tpu_custom_call.1} parent=39 // pred_fallthru
          _
        %s233 = sand.u32 %s31, 1
        %s234 = scalar_lea.sflag [#allocation3], %s233
        %s235 = sand.u32 %s31, 1
        %s236 = smul.addr %s235, 4
        %s237 = scalar_lea.vmem [#allocation2], %s236
        %p238 = pneg %p44
        %p239 = pneg %p41
        %p240 = pneg %p65
        %p241 = pneg %p62
        %p242 = pneg %p86
        %p243 = pneg %p83
        %p244 = pneg %p107
        %p245 = pneg %p104
        %p246 = pneg %p128
        %p247 = pneg %p125
        %p248 = pneg %p154
        %p249 = pneg %p151
        %s250 = sand.u32 %s141, 1
        %s251 = scalar_lea.sflag [#allocation4], %s250
        %s252 = sand.u32 %s141, 1
        %s253 = smul.addr %s252, 4
        %s254 = scalar_lea.vmem [#allocation7], %s253
        %v256 = vld [vmem:[%s224] sm:$0xf]
        %v257 = vunpack.c.l.bf16 %v256
        %vm258 = vcmask 261120
        %v259 = vsel %vm258, %v257, 0.0
        %260 = vadd.xlane.f32.xlu0 %v259
        %v261 = vpop.xlane.xlu0 %260
        %v262 = vrcp.pop 32.0
        %v263 = vmul.f32 %v261, %v262
        %v264 = vsub.f32 %v257, %v263
        %v265 = vmul.f32 %v264, %v264
        %v266 = vsel %vm258, %v265, 0.0
        %267 = vadd.xlane.f32.xlu0 %v266
        %v268 = vpop.xlane.xlu0 %267
        %v269 = vmul.f32 %v268, %v262
        %v270 = vadd.f32 %v269, 1e-05
        %v271 = vrsqrt.pop %v270
        %v272 = vmul.f32 %v264, %v271
        %v273 = vld [vmem:[%s1] sm:$0x1]
        %v275 = vlaneseq
        %v276 = vshrl.u32 %v275, 7
        %v277 = vsub.s32 0, %v276
        %v278 = vrot.slane %v273, %v277
        %v280 = vmul.f32 %v272, %v278
        %v281 = vld [vmem:[%s2] sm:$0x1]
        %v283 = vlaneseq
        %v284 = vshrl.u32 %v283, 7
        %v285 = vsub.s32 0, %v284
        %v286 = vrot.slane %v281, %v285
        %v288 = vadd.f32 %v280, %v286
        %v289 = vpack.c.bf16 %v288, %v288
        %v290 = vld [vmem:[#allocation5] sm:$0xf]
        %v291 = vld [vmem:[#allocation5 + $0x4] sm:$0xf]
        %v292 = vld [vmem:[#allocation5 + $0x8] sm:$0xf]
        %v293 = vld [vmem:[#allocation5 + $0xc] sm:$0xf]
        %v294 = vld [vmem:[%s4] sm:$0x1]
        %v296 = vlaneseq
        %v297 = vshrl.u32 %v296, 7
        %v298 = vsub.s32 0, %v297
        %v299 = vrot.slane %v294, %v298
        %v305 = vunpack.c.l.b16 %v290
        %v306 = vunpack.c.l.b16 %v291
        %v307 = vunpack.c.l.b16 %v292
        %v308 = vunpack.c.l.b16 %v293
        %v309 = vpack.c.b16 %v306, %v305
        %v310 = vpack.c.b16 %v308, %v307
        %v314 = vsel %vm258, %v289, 0
        %316 = vmatprep.subr.bf16.mxu0 0
        %317 = vmatpush1.bf16.msra.mxu0 %v309
        %318 = vmatprep.subr.bf16.mxu0 0
        %319 = vmatpush1.bf16.msra.mxu0 %v310
        %320 = vmatprep.subr.bf16.mxu0 0
        %321 = vmatpush1.bf16.msra.mxu0 0
        %322 = vmatprep.subr.bf16.mxu0 0
        %323 = vmatpush1.bf16.msra.mxu0 0
        %324 = vmatprep.subr.bf16.mxu0 0
        %325 = vmatpush1.bf16.msra.mxu0 0
        %326 = vmatprep.subr.bf16.mxu0 0
        %327 = vmatpush1.bf16.msra.mxu0 0
        %328 = vmatprep.subr.bf16.mxu0 0
        %329 = vmatpush1.bf16.msra.mxu0 0
        %330 = vmatprep.subr.bf16.mxu0 0
        %331 = vmatpush1.bf16.msra.mxu0 0
        %332 = vmatprep.subr.bf16.mxu0 0
        %333 = vmatpush1.bf16.msra.mxu0 0
        %334 = vmatprep.subr.bf16.mxu0 0
        %335 = vmatpush1.bf16.msra.mxu0 0
        %336 = vmatprep.subr.bf16.mxu0 0
        %337 = vmatpush1.bf16.msra.mxu0 0
        %338 = vmatprep.subr.bf16.mxu0 0
        %339 = vmatpush1.bf16.msra.mxu0 0
        %340 = vmatprep.subr.bf16.mxu0 0
        %341 = vmatpush1.bf16.msra.mxu0 0
        %342 = vmatprep.subr.bf16.mxu0 0
        %343 = vmatpush1.bf16.msra.mxu0 0
        %344 = vmatprep.subr.bf16.mxu0 0
        %345 = vmatpush1.bf16.msra.mxu0 0
        %346 = vmatprep.subr.bf16.mxu0 0
        %347 = vmatpush1.bf16.msra.mxu0 0
        %348 = vmatprep.mubr.bf16.mxu0 0
        %349 = vmatmul.mubr.bf16.gmra.mrb[0].mxu0 %v314
        %v350 = vpop.f32.mrb[0].mxu0
        %v351 = vadd.f32 %v299, %v350
        %v352 = vpop.f32.mrb[0].mxu0
        %v353 = vpop.f32.mrb[0].mxu0
        %v354 = vpop.f32.mrb[0].mxu0
        %355 = vdwg.mxu0
        %v356 = vpack.c.bf16 %v351, %v351
        %vm357 = vcmask 781312
        %358 = vst.msk [vmem:[%s254] sm:$0xf] %vm357, %v356
        %s359 = sand.u32 %s141, 1
        %s360 = scalar_lea.sflag [#allocation4], %s359
        %s361 = sand.u32 %s141, 1
        %s362 = smul.addr %s361, 4
        %s363 = scalar_lea.vmem [#allocation7], %s362
        // Predicated region
        $region49: #{tpu_custom_call.1} parent=39 // pred_check
          %p364 = pneg %p151
        $region50: #{tpu_custom_call.1} parent=39 // pred_check_branch
          %366 = sbr.rel (%p364) target = $region52
        $region51: #{tpu_custom_call.1} parent=39 // pred_region
          %s368 = ssub.s32 64, 64
          %369 = vsyncadd %s360, %s368
          %s370 = smul.addr %s23, 64
          %s371 = scalar_lea.hbm %s5, %s370
          %s373 = sshll.u32 %s363, 4
          %s374 = int_to_ptr.vmem [resolvable:$true] %s373
          %376 = dma.vmem_to_hbm [thread:$0]  %s374, 64, %s371, %s360
        $region52: #{tpu_custom_call.1} parent=39 // pred_fallthru
          _
      $region40: #{tpu_custom_call.1} parent=5 // pred_fallthru
        _
      %p377 = scmp.le.s32.totalorder 2, %s18
      // Predicated region
      $region53: #{tpu_custom_call.1} parent=5 // pred_check
        %p378 = pneg %p377
      $region54: #{tpu_custom_call.1} parent=5 // pred_check_branch
        %380 = sbr.rel (%p378) target = $region56
      $region55: #{tpu_custom_call.1} parent=5 // pred_region
        %s381 = ssub.s32 %s18, 2
        // Predicated region
        $region57: #{tpu_custom_call.1} parent=55 // pred_check
          %p382 = pneg %p157
        $region58: #{tpu_custom_call.1} parent=55 // pred_check_branch
          %384 = sbr.rel (%p382) target = $region60
        $region59: #{tpu_custom_call.1} parent=55 // pred_region
          %s385 = sand.u32 %s142, 1
          %s386 = scalar_lea.sflag [#allocation4], %s385
          %s387 = sand.u32 %s142, 1
          %s388 = smul.addr %s387, 4
          %s389 = scalar_lea.vmem [#allocation7], %s388
          %390 = dma.done %s386, 64
        $region60: #{tpu_custom_call.1} parent=55 // pred_fallthru
          _
      $region56: #{tpu_custom_call.1} parent=5 // pred_fallthru
        _
    $region6: #{tpu_custom_call.1} parent=1 // loop_footer
      %s22 = sadd.s32 1, %s18
    $region7: #{tpu_custom_call.1} parent=1 // loop_footer_branch
      %17 = sbr.rel target = $region3
    $region8: #{tpu_custom_call.1} parent=1 // loop_exit
      _
    %391 = vsyncpa [#allocation3], 1
    %s392 = scalar_lea.sflag [#allocation3], 1
    %393 = vsyncpa %s392, 1
    %394 = vsyncpa [#allocation6], 1
    %395 = vsyncpa [#allocation4], 1
    %s396 = scalar_lea.sflag [#allocation4], 1
    %397 = vsyncpa %s396, 1

</llo_original>
